<compile_context>
chip_gen: v7x
topology: tpu7x:2x2x1
jax: 0.10.0
libtpu: 0.0.40
codegen_flags: <defaults>
</compile_context>

<pallas_src>
import functools

import jax
import jax.numpy as jnp
from jax import lax
from jax.experimental import pallas as pl
from jax.experimental.pallas import tpu as pltpu

EPS = 1e-5


def _resnet_block_kernel(x_ref, bw1_ref, bw2_ref, g1_ref, be1_ref,
                         g2_ref, be2_ref, out_ref, *, C, W):
    """Whole ResnetBlock forward in the lane-dense packed (N, H, W*C) layout.

    x_ref   : (N, H, W*C)      f32   packed NHWC input
    bw*_ref : (3*W*C, W*C)     bf16  K-stacked block-banded conv weights (dy, dx folded in)
    g*,be*  : (1, W*C)         f32   BN gamma / beta tiled across w
    out_ref : (N, H, W*C)      f32   lane-dense output
    """
    N, H, WC = x_ref.shape
    NH = N * H
    inv_n = 1.0 / float(N * H * W)

    x = x_ref[...]                                    # (N, H, WC) f32

    def im2col(a):
        # Pack input rows h-1 / h / h+1 along the lane axis -> (NH, 3*WC).
        # Boundary rows are zero (the H-direction zero padding); the W-direction
        # padding is handled by zeroed rows of the banded weight, so K stays a
        # lane-aligned multiple of 128.  The row shifts lower to cheap XLU
        # sublane shifts/selects — no VMEM scratch, no masked stores.
        zrow = jnp.zeros((N, 1, WC), jnp.float32)
        above = jnp.concatenate([zrow, a[:, :H - 1, :]], axis=1)   # row h-1
        below = jnp.concatenate([a[:, 1:, :], zrow], axis=1)       # row h+1
        slab = jnp.concatenate([above, a, below], axis=2)          # (N, H, 3*WC)
        return slab.reshape(NH, 3 * WC).astype(jnp.bfloat16)

    def conv3x3(a, bw_ref):
        # Single MXU matmul per conv: (NH, 3*WC) x (3*WC, WC), f32 accumulation.
        return jnp.dot(im2col(a), bw_ref[...],
                       preferred_element_type=jnp.float32)         # (NH, WC)

    def channel_totals(vec):
        # Reduce the W copies of each channel along the lane axis; rolling by
        # multiples of C keeps each channel's lane class invariant.  XLU rolls,
        # exact f32.  Result stays tiled across w.
        if W & (W - 1) == 0:                     # power-of-two W: log-step reduce
            total, shift = vec, C
            while shift < WC:
                total = total + pltpu.roll(total, shift, axis=1)
                shift *= 2
            return total
        total = vec                              # generic fallback
        for k in range(1, W):
            total = total + pltpu.roll(vec, k * C, axis=1)
        return total

    def bn(acc, g_ref, be_ref):
        # Training-mode batch norm; sum and sum-of-squares in ONE pass over acc.
        # NOTE: single-pass E[x^2]-mean^2 variance (fine at this scale/tolerance).
        stats = jnp.sum(jnp.concatenate([acc, acc * acc], axis=1),
                        axis=0, keepdims=True)                      # (1, 2*WC)
        mean = channel_totals(stats[:, :WC]) * inv_n
        msq = channel_totals(stats[:, WC:]) * inv_n
        var = msq - mean * mean
        scale = g_ref[...] * lax.rsqrt(var + EPS)
        shift = be_ref[...] - mean * scale
        return acc * scale + shift

    # conv1 -> bn1 -> relu
    y1 = jnp.maximum(bn(conv3x3(x, bw1_ref), g1_ref, be1_ref), 0.0)        # (NH, WC)
    # conv2 -> bn2
    y2 = bn(conv3x3(y1.reshape(N, H, WC), bw2_ref), g2_ref, be2_ref)       # (NH, WC)
    # residual add (identity = original f32 input) + final relu
    out = jnp.maximum(x.reshape(NH, WC) + y2, 0.0)
    out_ref[...] = out.reshape(N, H, WC)


def _banded_weight(w_oihw, W):
    """OIHW (Cout,Cin,3,3) -> (3*W*Cin, W*Cout) K-stacked block-banded matrix.

    Row block dy holds the taps that multiply input row h+dy-1; within a block,
    bw[win*Cin+ci, wout*Cout+co] = w[co, ci, dy, dx] with dx = win - wout + 1.
    Out-of-range dx rows are simply absent (== zeroed), which is numerically
    identical to zero-padding the W axis, so K stays lane-aligned at W*C."""
    Cout, Cin, KH, KW = w_oihw.shape
    w_hwio = jnp.transpose(w_oihw, (2, 3, 1, 0)).astype(jnp.float32)  # (3,3,Ci,Co)
    blocks = []
    for dy in range(KH):
        blk = jnp.zeros((W, Cin, W, Cout), jnp.float32)
        for dx in range(KW):
            sel = jnp.eye(W, W, k=1 - dx, dtype=jnp.float32)  # sel[win,wout]=1 iff win=wout+dx-1
            blk = blk + jnp.einsum('pw,io->piwo', sel, w_hwio[dy, dx])
        blocks.append(blk.reshape(W * Cin, W * Cout))
    return jnp.concatenate(blocks, axis=0)                    # (3*W*Cin, W*Cout)


def _tile_c(v, W):
    # (C,) channel vector -> (1, W*C), repeated per spatial column (packed lane layout).
    C = v.shape[0]
    return jnp.tile(v.astype(jnp.float32).reshape(1, C), (1, W))


def _pallas_resnet_block(x_packed, bw1, bw2, g1t, be1t, g2t, be2t, *, W, C):
    N, H, WC = x_packed.shape
    kernel = functools.partial(_resnet_block_kernel, C=C, W=W)

    # VMEM budget from the actual resident buffers + in-kernel temporaries, with
    # 2x headroom for compiler scratch; clamped well under v7x's 64 MiB physical VMEM.
    io_bytes = (2 * N * H * WC * 4                    # x + out (f32)
                + bw1.size * 2 + bw2.size * 2         # banded weights (bf16)
                + 4 * WC * 4)                         # gamma/beta tiles (f32)
    tmp_bytes = N * H * 3 * WC * 2 + 4 * N * H * WC * 4   # im2col slab + f32 temps
    vmem_limit = int(min(64 * 1024 * 1024,
                         max(4 * 1024 * 1024, 2 * (io_bytes + tmp_bytes))))

    vmem = pl.BlockSpec(memory_space=pltpu.MemorySpace.VMEM)
    return pl.pallas_call(
        kernel,
        out_shape=jax.ShapeDtypeStruct((N, H, WC), jnp.float32),
        in_specs=[vmem] * 7,
        out_specs=vmem,
        compiler_params=pltpu.CompilerParams(vmem_limit_bytes=vmem_limit),
    )(x_packed, bw1, bw2, g1t, be1t, g2t, be2t)


@functools.partial(jax.jit, static_argnames=("W", "C"))
def resnet_block_forward_packed(x_packed, w1, g1, be1, w2, g2, be2, *, W, C):
    """Fast path: activations stay in the lane-dense packed (N, H, W*C) layout so
    chained ResnetBlocks pay no NCHW<->packed transposes between blocks."""
    bw1 = _banded_weight(w1, W).astype(jnp.bfloat16)
    bw2 = _banded_weight(w2, W).astype(jnp.bfloat16)
    return _pallas_resnet_block(x_packed, bw1, bw2,
                                _tile_c(g1, W), _tile_c(be1, W),
                                _tile_c(g2, W), _tile_c(be2, W), W=W, C=C)


@jax.jit
def resnet_block_forward(x_nchw, w1, b1, g1, be1, w2, b2, g2, be2):
    """x_nchw: (N, C, H, W) f32, PyTorch layout.  w1/w2: OIHW conv weights.
    b1/b2 (conv biases) are accepted but unused: training-mode BN subtracts the
    batch mean, which cancels a per-channel bias exactly."""
    N, Cin, H, W = x_nchw.shape
    Cout = w1.shape[0]
    # downSample=False residual add requires matching channel counts.
    assert Cin == Cout, "ResnetBlock with downSample=False needs input_dim == output_dim"
    C = Cout
    # Layout glue only (amortized across blocks via the packed entry point in real use).
    x_packed = (jnp.transpose(x_nchw, (0, 2, 3, 1))
                .reshape(N, H, W * C).astype(jnp.float32))
    out_packed = resnet_block_forward_packed(x_packed, w1, g1, be1, w2, g2, be2, W=W, C=C)
    return jnp.transpose(out_packed.reshape(N, H, W, C), (0, 3, 1, 2))


def _reference_forward(x_nchw, w1, b1, g1, be1, w2, b2, g2, be2):
    """Pure-JAX reference replicating the PyTorch forward (conv inputs cast to
    bf16 with f32 accumulation, matching the kernel's MXU dtype)."""
    x = jnp.transpose(x_nchw, (0, 2, 3, 1)).astype(jnp.float32)
    dn = ("NHWC", "HWIO", "NHWC")

    def conv(inp, w_oihw, b):
        w = jnp.transpose(w_oihw, (2, 3, 1, 0))
        y = lax.conv_general_dilated(
            inp.astype(jnp.bfloat16), w.astype(jnp.bfloat16), (1, 1), "SAME",
            dimension_numbers=dn, preferred_element_type=jnp.float32)
        return y + b.reshape(1, 1, 1, -1)

    def bn(inp, g, be):
        m = jnp.mean(inp, axis=(0, 1, 2), keepdims=True)
        v = jnp.mean((inp - m) ** 2, axis=(0, 1, 2), keepdims=True)
        return (inp - m) * lax.rsqrt(v + EPS) * g.reshape(1, 1, 1, -1) \
            + be.reshape(1, 1, 1, -1)

    y = jnp.maximum(bn(conv(x, w1, b1), g1, be1), 0.0)
    y = bn(conv(y, w2, b2), g2, be2)
    y = jnp.maximum(x + y, 0.0)
    return jnp.transpose(y, (0, 3, 1, 2))


if __name__ == "__main__":
    # input_dim = output_dim = 8 (required for downSample=False residual add),
    # batch=2, spatial=16x16  ->  packed lane width W*C = 128 (lane-dense).
    N, C, H, W = 2, 8, 16, 16
    key = jax.random.PRNGKey(0)
    kx, kw1, kb1, kw2, kb2 = jax.random.split(key, 5)

    x = jax.random.normal(kx, (N, C, H, W), jnp.float32)
    w1 = 0.1 * jax.random.normal(kw1, (C, C, 3, 3), jnp.float32)  # conv1 OIHW
    b1 = 0.1 * jax.random.normal(kb1, (C,), jnp.float32)
    w2 = 0.1 * jax.random.normal(kw2, (C, C, 3, 3), jnp.float32)  # conv2 OIHW
    b2 = 0.1 * jax.random.normal(kb2, (C,), jnp.float32)
    g1 = jnp.ones((C,), jnp.float32)    # BatchNorm2d default weight
    be1 = jnp.zeros((C,), jnp.float32)  # BatchNorm2d default bias
    g2 = jnp.ones((C,), jnp.float32)
    be2 = jnp.zeros((C,), jnp.float32)

    out = resnet_block_forward(x, w1, b1, g1, be1, w2, b2, g2, be2)
    out = jax.block_until_ready(out)

    ref = _reference_forward(x, w1, b1, g1, be1, w2, b2, g2, be2)
    assert out.shape == (N, C, H, W)
    err = jnp.max(jnp.abs(out - ref))
    assert jnp.allclose(out, ref, atol=2e-3, rtol=2e-3), f"max abs err {err}"

    print("KERNEL_OK")
</pallas_src>

<mosaic_0001>
module attributes {stable_mosaic.version = 11 : i64} {
  func.func @_resnet_block_kernel(%arg0: memref<2x16x128xf32, #tpu.memory_space<vmem>>, %arg1: memref<384x128xbf16, #tpu.memory_space<vmem>>, %arg2: memref<384x128xbf16, #tpu.memory_space<vmem>>, %arg3: memref<1x128xf32, #tpu.memory_space<vmem>>, %arg4: memref<1x128xf32, #tpu.memory_space<vmem>>, %arg5: memref<1x128xf32, #tpu.memory_space<vmem>>, %arg6: memref<1x128xf32, #tpu.memory_space<vmem>>, %arg7: memref<2x16x128xf32, #tpu.memory_space<vmem>>) attributes {dimension_semantics = [], scalar_prefetch = 0 : i64, scratch_operands = 0 : i64, tpu.core_type = #tpu.core_type<tc>} {
    %c0 = arith.constant 0 : index
    %c0_0 = arith.constant 0 : index
    %c0_1 = arith.constant 0 : index
    %0 = vector.load %arg0[%c0, %c0_0, %c0_1] : memref<2x16x128xf32, #tpu.memory_space<vmem>>, vector<2x16x128xf32>
    %cst = arith.constant 0.000000e+00 : f32
    %1 = vector.broadcast %cst : f32 to vector<2x1x128xf32>
    %2 = vector.extract_strided_slice %0 {offsets = [0, 0, 0], sizes = [2, 15, 128], strides = [1, 1, 1]} : vector<2x16x128xf32> to vector<2x15x128xf32>
    %3 = tpu.concatenate %1, %2 in 1 : vector<2x1x128xf32>, vector<2x15x128xf32> -> vector<2x16x128xf32>
    %4 = vector.extract_strided_slice %0 {offsets = [0, 1, 0], sizes = [2, 15, 128], strides = [1, 1, 1]} : vector<2x16x128xf32> to vector<2x15x128xf32>
    %5 = tpu.concatenate %4, %1 in 1 : vector<2x15x128xf32>, vector<2x1x128xf32> -> vector<2x16x128xf32>
    %6 = tpu.concatenate %3, %0, %5 in 2 : vector<2x16x128xf32>, vector<2x16x128xf32>, vector<2x16x128xf32> -> vector<2x16x384xf32>
    %7 = vector.shape_cast %6 : vector<2x16x384xf32> to vector<32x384xf32>
    %8 = arith.truncf %7 : vector<32x384xf32> to vector<32x384xbf16>
    %c0_2 = arith.constant 0 : index
    %c0_3 = arith.constant 0 : index
    %9 = vector.load %arg1[%c0_2, %c0_3] : memref<384x128xbf16, #tpu.memory_space<vmem>>, vector<384x128xbf16>
    %cst_4 = arith.constant dense<0.000000e+00> : vector<32x128xf32>
    %10 = tpu.matmul %8, %9, %cst_4 {dimension_numbers = #tpu.dot_dimension_numbers<[1], [0], [0], [1], [0, 0, 1, 1], [], []>} : vector<32x384xbf16>, vector<384x128xbf16>, vector<32x128xf32> -> vector<32x128xf32>
    %11 = arith.mulf %10, %10 : vector<32x128xf32>
    %12 = tpu.concatenate %10, %11 in 1 : vector<32x128xf32>, vector<32x128xf32> -> vector<32x256xf32>
    %cst_5 = arith.constant dense<0.000000e+00> : vector<256xf32>
    %13 = vector.multi_reduction <add>, %12, %cst_5 [0] : vector<32x256xf32> to vector<256xf32>
    %14 = vector.shape_cast %13 : vector<256xf32> to vector<1x256xf32>
    %15 = vector.extract_strided_slice %14 {offsets = [0, 0], sizes = [1, 128], strides = [1, 1]} : vector<1x256xf32> to vector<1x128xf32>
    %c8_i32 = arith.constant 8 : i32
    %16 = tpu.dynamic_rotate %15 by %c8_i32 dim 1 : vector<1x128xf32>, i32 -> vector<1x128xf32>
    %17 = arith.addf %15, %16 : vector<1x128xf32>
    %c16_i32 = arith.constant 16 : i32
    %18 = tpu.dynamic_rotate %17 by %c16_i32 dim 1 : vector<1x128xf32>, i32 -> vector<1x128xf32>
    %19 = arith.addf %17, %18 : vector<1x128xf32>
    %c32_i32 = arith.constant 32 : i32
    %20 = tpu.dynamic_rotate %19 by %c32_i32 dim 1 : vector<1x128xf32>, i32 -> vector<1x128xf32>
    %21 = arith.addf %19, %20 : vector<1x128xf32>
    %c64_i32 = arith.constant 64 : i32
    %22 = tpu.dynamic_rotate %21 by %c64_i32 dim 1 : vector<1x128xf32>, i32 -> vector<1x128xf32>
    %23 = arith.addf %21, %22 : vector<1x128xf32>
    %cst_6 = arith.constant 0.001953125 : f32
    %24 = vector.broadcast %cst_6 : f32 to vector<1x128xf32>
    %25 = arith.mulf %23, %24 : vector<1x128xf32>
    %26 = vector.extract_strided_slice %14 {offsets = [0, 128], sizes = [1, 128], strides = [1, 1]} : vector<1x256xf32> to vector<1x128xf32>
    %c8_i32_7 = arith.constant 8 : i32
    %27 = tpu.dynamic_rotate %26 by %c8_i32_7 dim 1 : vector<1x128xf32>, i32 -> vector<1x128xf32>
    %28 = arith.addf %26, %27 : vector<1x128xf32>
    %c16_i32_8 = arith.constant 16 : i32
    %29 = tpu.dynamic_rotate %28 by %c16_i32_8 dim 1 : vector<1x128xf32>, i32 -> vector<1x128xf32>
    %30 = arith.addf %28, %29 : vector<1x128xf32>
    %c32_i32_9 = arith.constant 32 : i32
    %31 = tpu.dynamic_rotate %30 by %c32_i32_9 dim 1 : vector<1x128xf32>, i32 -> vector<1x128xf32>
    %32 = arith.addf %30, %31 : vector<1x128xf32>
    %c64_i32_10 = arith.constant 64 : i32
    %33 = tpu.dynamic_rotate %32 by %c64_i32_10 dim 1 : vector<1x128xf32>, i32 -> vector<1x128xf32>
    %34 = arith.addf %32, %33 : vector<1x128xf32>
    %cst_11 = arith.constant 0.001953125 : f32
    %35 = vector.broadcast %cst_11 : f32 to vector<1x128xf32>
    %36 = arith.mulf %34, %35 : vector<1x128xf32>
    %37 = arith.mulf %25, %25 : vector<1x128xf32>
    %38 = arith.subf %36, %37 : vector<1x128xf32>
    %c0_12 = arith.constant 0 : index
    %c0_13 = arith.constant 0 : index
    %39 = vector.load %arg3[%c0_12, %c0_13] : memref<1x128xf32, #tpu.memory_space<vmem>>, vector<1x128xf32>
    %cst_14 = arith.constant 9.99999974E-6 : f32
    %40 = vector.broadcast %cst_14 : f32 to vector<1x128xf32>
    %41 = arith.addf %38, %40 : vector<1x128xf32>
    %42 = math.rsqrt %41 : vector<1x128xf32>
    %43 = arith.mulf %39, %42 : vector<1x128xf32>
    %c0_15 = arith.constant 0 : index
    %c0_16 = arith.constant 0 : index
    %44 = vector.load %arg4[%c0_15, %c0_16] : memref<1x128xf32, #tpu.memory_space<vmem>>, vector<1x128xf32>
    %45 = arith.mulf %25, %43 : vector<1x128xf32>
    %46 = arith.subf %44, %45 : vector<1x128xf32>
    %47 = vector.broadcast %43 : vector<1x128xf32> to vector<32x128xf32>
    %48 = arith.mulf %10, %47 : vector<32x128xf32>
    %49 = vector.broadcast %46 : vector<1x128xf32> to vector<32x128xf32>
    %50 = arith.addf %48, %49 : vector<32x128xf32>
    %cst_17 = arith.constant 0.000000e+00 : f32
    %51 = vector.broadcast %cst_17 : f32 to vector<32x128xf32>
    %52 = arith.maximumf %50, %51 : vector<32x128xf32>
    %53 = vector.shape_cast %52 : vector<32x128xf32> to vector<2x16x128xf32>
    %cst_18 = arith.constant 0.000000e+00 : f32
    %54 = vector.broadcast %cst_18 : f32 to vector<2x1x128xf32>
    %55 = vector.extract_strided_slice %53 {offsets = [0, 0, 0], sizes = [2, 15, 128], strides = [1, 1, 1]} : vector<2x16x128xf32> to vector<2x15x128xf32>
    %56 = tpu.concatenate %54, %55 in 1 : vector<2x1x128xf32>, vector<2x15x128xf32> -> vector<2x16x128xf32>
    %57 = vector.extract_strided_slice %53 {offsets = [0, 1, 0], sizes = [2, 15, 128], strides = [1, 1, 1]} : vector<2x16x128xf32> to vector<2x15x128xf32>
    %58 = tpu.concatenate %57, %54 in 1 : vector<2x15x128xf32>, vector<2x1x128xf32> -> vector<2x16x128xf32>
    %59 = tpu.concatenate %56, %53, %58 in 2 : vector<2x16x128xf32>, vector<2x16x128xf32>, vector<2x16x128xf32> -> vector<2x16x384xf32>
    %60 = vector.shape_cast %59 : vector<2x16x384xf32> to vector<32x384xf32>
    %61 = arith.truncf %60 : vector<32x384xf32> to vector<32x384xbf16>
    %c0_19 = arith.constant 0 : index
    %c0_20 = arith.constant 0 : index
    %62 = vector.load %arg2[%c0_19, %c0_20] : memref<384x128xbf16, #tpu.memory_space<vmem>>, vector<384x128xbf16>
    %cst_21 = arith.constant dense<0.000000e+00> : vector<32x128xf32>
    %63 = tpu.matmul %61, %62, %cst_21 {dimension_numbers = #tpu.dot_dimension_numbers<[1], [0], [0], [1], [0, 0, 1, 1], [], []>} : vector<32x384xbf16>, vector<384x128xbf16>, vector<32x128xf32> -> vector<32x128xf32>
    %64 = arith.mulf %63, %63 : vector<32x128xf32>
    %65 = tpu.concatenate %63, %64 in 1 : vector<32x128xf32>, vector<32x128xf32> -> vector<32x256xf32>
    %cst_22 = arith.constant dense<0.000000e+00> : vector<256xf32>
    %66 = vector.multi_reduction <add>, %65, %cst_22 [0] : vector<32x256xf32> to vector<256xf32>
    %67 = vector.shape_cast %66 : vector<256xf32> to vector<1x256xf32>
    %68 = vector.extract_strided_slice %67 {offsets = [0, 0], sizes = [1, 128], strides = [1, 1]} : vector<1x256xf32> to vector<1x128xf32>
    %c8_i32_23 = arith.constant 8 : i32
    %69 = tpu.dynamic_rotate %68 by %c8_i32_23 dim 1 : vector<1x128xf32>, i32 -> vector<1x128xf32>
    %70 = arith.addf %68, %69 : vector<1x128xf32>
    %c16_i32_24 = arith.constant 16 : i32
    %71 = tpu.dynamic_rotate %70 by %c16_i32_24 dim 1 : vector<1x128xf32>, i32 -> vector<1x128xf32>
    %72 = arith.addf %70, %71 : vector<1x128xf32>
    %c32_i32_25 = arith.constant 32 : i32
    %73 = tpu.dynamic_rotate %72 by %c32_i32_25 dim 1 : vector<1x128xf32>, i32 -> vector<1x128xf32>
    %74 = arith.addf %72, %73 : vector<1x128xf32>
    %c64_i32_26 = arith.constant 64 : i32
    %75 = tpu.dynamic_rotate %74 by %c64_i32_26 dim 1 : vector<1x128xf32>, i32 -> vector<1x128xf32>
    %76 = arith.addf %74, %75 : vector<1x128xf32>
    %cst_27 = arith.constant 0.001953125 : f32
    %77 = vector.broadcast %cst_27 : f32 to vector<1x128xf32>
    %78 = arith.mulf %76, %77 : vector<1x128xf32>
    %79 = vector.extract_strided_slice %67 {offsets = [0, 128], sizes = [1, 128], strides = [1, 1]} : vector<1x256xf32> to vector<1x128xf32>
    %c8_i32_28 = arith.constant 8 : i32
    %80 = tpu.dynamic_rotate %79 by %c8_i32_28 dim 1 : vector<1x128xf32>, i32 -> vector<1x128xf32>
    %81 = arith.addf %79, %80 : vector<1x128xf32>
    %c16_i32_29 = arith.constant 16 : i32
    %82 = tpu.dynamic_rotate %81 by %c16_i32_29 dim 1 : vector<1x128xf32>, i32 -> vector<1x128xf32>
    %83 = arith.addf %81, %82 : vector<1x128xf32>
    %c32_i32_30 = arith.constant 32 : i32
    %84 = tpu.dynamic_rotate %83 by %c32_i32_30 dim 1 : vector<1x128xf32>, i32 -> vector<1x128xf32>
    %85 = arith.addf %83, %84 : vector<1x128xf32>
    %c64_i32_31 = arith.constant 64 : i32
    %86 = tpu.dynamic_rotate %85 by %c64_i32_31 dim 1 : vector<1x128xf32>, i32 -> vector<1x128xf32>
    %87 = arith.addf %85, %86 : vector<1x128xf32>
    %cst_32 = arith.constant 0.001953125 : f32
    %88 = vector.broadcast %cst_32 : f32 to vector<1x128xf32>
    %89 = arith.mulf %87, %88 : vector<1x128xf32>
    %90 = arith.mulf %78, %78 : vector<1x128xf32>
    %91 = arith.subf %89, %90 : vector<1x128xf32>
    %c0_33 = arith.constant 0 : index
    %c0_34 = arith.constant 0 : index
    %92 = vector.load %arg5[%c0_33, %c0_34] : memref<1x128xf32, #tpu.memory_space<vmem>>, vector<1x128xf32>
    %cst_35 = arith.constant 9.99999974E-6 : f32
    %93 = vector.broadcast %cst_35 : f32 to vector<1x128xf32>
    %94 = arith.addf %91, %93 : vector<1x128xf32>
    %95 = math.rsqrt %94 : vector<1x128xf32>
    %96 = arith.mulf %92, %95 : vector<1x128xf32>
    %c0_36 = arith.constant 0 : index
    %c0_37 = arith.constant 0 : index
    %97 = vector.load %arg6[%c0_36, %c0_37] : memref<1x128xf32, #tpu.memory_space<vmem>>, vector<1x128xf32>
    %98 = arith.mulf %78, %96 : vector<1x128xf32>
    %99 = arith.subf %97, %98 : vector<1x128xf32>
    %100 = vector.broadcast %96 : vector<1x128xf32> to vector<32x128xf32>
    %101 = arith.mulf %63, %100 : vector<32x128xf32>
    %102 = vector.broadcast %99 : vector<1x128xf32> to vector<32x128xf32>
    %103 = arith.addf %101, %102 : vector<32x128xf32>
    %104 = vector.shape_cast %0 : vector<2x16x128xf32> to vector<32x128xf32>
    %105 = arith.addf %104, %103 : vector<32x128xf32>
    %cst_38 = arith.constant 0.000000e+00 : f32
    %106 = vector.broadcast %cst_38 : f32 to vector<32x128xf32>
    %107 = arith.maximumf %105, %106 : vector<32x128xf32>
    %108 = vector.shape_cast %107 : vector<32x128xf32> to vector<2x16x128xf32>
    %c0_39 = arith.constant 0 : index
    %c0_40 = arith.constant 0 : index
    %c0_41 = arith.constant 0 : index
    %109 = vector.load %arg7[%c0_39, %c0_40, %c0_41] : memref<2x16x128xf32, #tpu.memory_space<vmem>>, vector<2x16x128xf32>
    tpu.vector_store %arg7[%c0_39, %c0_40, %c0_41], %108 {strides = array<i32>} : memref<2x16x128xf32, #tpu.memory_space<vmem>>, vector<2x16x128xf32>,
    return
  }
}

</mosaic_0001>

<llo_original>
// kernel: resnet_block_forward_packed.1
$region0: #{resnet_block_forward_packed.1}
  #allocation0 [shape = 'u32[]', space=smem, size = 0x4, offset = 0x4, fixed_abs, tag = 'smem constant byte address 0x4 - core index']
  #allocation1 [shape = 'u32[144,128]{1,0:T(1,128)}', space=vmem, size = 0x12000, scoped, tag = 'internal scratch']
  %s0 = inlined_call_operand.vmem [shape: f32[2,16,128], index: 0, kind: input, shape index: {}]
  %s1 = inlined_call_operand.vmem [shape: bf16[384,128], index: 1, kind: input, shape index: {}]
  %s2 = inlined_call_operand.vmem [shape: bf16[384,128], index: 2, kind: input, shape index: {}]
  %s3 = inlined_call_operand.vmem [shape: f32[1,128], index: 3, kind: input, shape index: {}]
  %s4 = inlined_call_operand.vmem [shape: f32[1,128], index: 4, kind: input, shape index: {}]
  %s5 = inlined_call_operand.vmem [shape: f32[1,128], index: 5, kind: input, shape index: {}]
  %s6 = inlined_call_operand.vmem [shape: f32[1,128], index: 6, kind: input, shape index: {}]
  %s7 = inlined_call_operand.hbm [shape: f32[2,16,128], index: 7, kind: output, shape index: {}]
  %s8 = sld [smem:[#allocation0]]
  $region38: #{resnet_block_forward_packed.1} parent=0
    _
  %s10 = ssub.s32 1, %s8
  %s11 = scalar_select 0, %s10, %s8
  $region1: #{resnet_block_forward_packed.1} parent=0
    #allocation2 [shape = 'u8[16384]{0}', space=vmem, size = 0x4000, scoped, tag = 'output window, operand 0, single buffered']
    #allocation3 [shape = 's32[1]{0}', space=sflag, size = 0x4, scoped, tag = 'scoped memory for resnet_block_forward_packed.1']
    %12 = vsyncpa [#allocation3], 0
    // Predicated region
    $region2: #{resnet_block_forward_packed.1} parent=1 // pred_check
      _
    $region3: #{resnet_block_forward_packed.1} parent=1 // pred_check_branch
      %14 = sbr.rel (0) target = $region5
    $region4: #{resnet_block_forward_packed.1} parent=1 // pred_region
      _
    $region5: #{resnet_block_forward_packed.1} parent=1 // pred_fallthru
      _
    // Predicated region
    $region6: #{resnet_block_forward_packed.1} parent=1 // pred_check
      _
    $region7: #{resnet_block_forward_packed.1} parent=1 // pred_check_branch
      %16 = sbr.rel (0) target = $region9
    $region8: #{resnet_block_forward_packed.1} parent=1 // pred_region
      _
    $region9: #{resnet_block_forward_packed.1} parent=1 // pred_fallthru
      _
    // Predicated region
    $region10: #{resnet_block_forward_packed.1} parent=1 // pred_check
      _
    $region11: #{resnet_block_forward_packed.1} parent=1 // pred_check_branch
      %18 = sbr.rel (0) target = $region13
    $region12: #{resnet_block_forward_packed.1} parent=1 // pred_region
      _
    $region13: #{resnet_block_forward_packed.1} parent=1 // pred_fallthru
      _
    // Predicated region
    $region14: #{resnet_block_forward_packed.1} parent=1 // pred_check
      _
    $region15: #{resnet_block_forward_packed.1} parent=1 // pred_check_branch
      %20 = sbr.rel (0) target = $region17
    $region16: #{resnet_block_forward_packed.1} parent=1 // pred_region
      _
    $region17: #{resnet_block_forward_packed.1} parent=1 // pred_fallthru
      _
    // Predicated region
    $region18: #{resnet_block_forward_packed.1} parent=1 // pred_check
      _
    $region19: #{resnet_block_forward_packed.1} parent=1 // pred_check_branch
      %22 = sbr.rel (0) target = $region21
    $region20: #{resnet_block_forward_packed.1} parent=1 // pred_region
      _
    $region21: #{resnet_block_forward_packed.1} parent=1 // pred_fallthru
      _
    // Predicated region
    $region22: #{resnet_block_forward_packed.1} parent=1 // pred_check
      _
    $region23: #{resnet_block_forward_packed.1} parent=1 // pred_check_branch
      %24 = sbr.rel (0) target = $region25
    $region24: #{resnet_block_forward_packed.1} parent=1 // pred_region
      _
    $region25: #{resnet_block_forward_packed.1} parent=1 // pred_fallthru
      _
    // Predicated region
    $region26: #{resnet_block_forward_packed.1} parent=1 // pred_check
      _
    $region27: #{resnet_block_forward_packed.1} parent=1 // pred_check_branch
      %26 = sbr.rel (0) target = $region29
    $region28: #{resnet_block_forward_packed.1} parent=1 // pred_region
      _
    $region29: #{resnet_block_forward_packed.1} parent=1 // pred_fallthru
      _
    %v28 = vld [vmem:[%s0] sm:$0xff]
    %v29 = vld [vmem:[%s0 + $0x8] sm:$0xff]
    %v30 = vld [vmem:[%s0 + $0x10] sm:$0xff]
    %v31 = vld [vmem:[%s0 + $0x18] sm:$0xff]
    %vm36 = vcmask 1040384
    %v37 = vrot.slane %v28, 7
    %v38 = vrot.slane %v29, 7
    %v39 = vsel %vm36, %v37, %v38
    %v40 = vrot.slane %v30, 7
    %v41 = vrot.slane %v31, 7
    %v42 = vsel %vm36, %v40, %v41
    %v47 = vsel %vm36, 0.0, %v37
    %v48 = vsel %vm36, 0.0, %v40
    %vm49 = vcmask 1046528
    %v50 = vrot.slane %v28, 1
    %v51 = vrot.slane %v29, 1
    %v52 = vsel %vm49, %v50, %v51
    %v53 = vrot.slane %v30, 1
    %v54 = vrot.slane %v31, 1
    %v55 = vsel %vm49, %v53, %v54
    %v60 = vsel %vm49, %v51, 0.0
    %v61 = vsel %vm49, %v54, 0.0
    %v62 = vpack.c.bf16 %v39, %v47
    %v63 = vpack.c.bf16 %v29, %v28
    %v64 = vpack.c.bf16 %v60, %v52
    %v65 = vpack.c.bf16 %v42, %v48
    %v66 = vpack.c.bf16 %v31, %v30
    %v67 = vpack.c.bf16 %v61, %v55
    %v68 = vld [vmem:[%s1] sm:$0xf]
    %v69 = vld [vmem:[%s1 + $0x4] sm:$0xf]
    %v70 = vld [vmem:[%s1 + $0x8] sm:$0xf]
    %v71 = vld [vmem:[%s1 + $0xc] sm:$0xf]
    %v72 = vld [vmem:[%s1 + $0x10] sm:$0xf]
    %v73 = vld [vmem:[%s1 + $0x14] sm:$0xf]
    %v74 = vld [vmem:[%s1 + $0x18] sm:$0xf]
    %v75 = vld [vmem:[%s1 + $0x1c] sm:$0xf]
    %v76 = vld [vmem:[%s1 + $0x20] sm:$0xf]
    %v77 = vld [vmem:[%s1 + $0x24] sm:$0xf]
    %v78 = vld [vmem:[%s1 + $0x28] sm:$0xf]
    %v79 = vld [vmem:[%s1 + $0x2c] sm:$0xf]
    %v80 = vld [vmem:[%s1 + $0x30] sm:$0xf]
    %v81 = vld [vmem:[%s1 + $0x34] sm:$0xf]
    %v82 = vld [vmem:[%s1 + $0x38] sm:$0xf]
    %v83 = vld [vmem:[%s1 + $0x3c] sm:$0xf]
    %v84 = vld [vmem:[%s1 + $0x40] sm:$0xf]
    %v85 = vld [vmem:[%s1 + $0x44] sm:$0xf]
    %v86 = vld [vmem:[%s1 + $0x48] sm:$0xf]
    %v87 = vld [vmem:[%s1 + $0x4c] sm:$0xf]
    %v88 = vld [vmem:[%s1 + $0x50] sm:$0xf]
    %v89 = vld [vmem:[%s1 + $0x54] sm:$0xf]
    %v90 = vld [vmem:[%s1 + $0x58] sm:$0xf]
    %v91 = vld [vmem:[%s1 + $0x5c] sm:$0xf]
    %v92 = vld [vmem:[%s1 + $0x60] sm:$0xf]
    %v93 = vld [vmem:[%s1 + $0x64] sm:$0xf]
    %v94 = vld [vmem:[%s1 + $0x68] sm:$0xf]
    %v95 = vld [vmem:[%s1 + $0x6c] sm:$0xf]
    %v96 = vld [vmem:[%s1 + $0x70] sm:$0xf]
    %v97 = vld [vmem:[%s1 + $0x74] sm:$0xf]
    %v98 = vld [vmem:[%s1 + $0x78] sm:$0xf]
    %v99 = vld [vmem:[%s1 + $0x7c] sm:$0xf]
    %v100 = vld [vmem:[%s1 + $0x80] sm:$0xf]
    %v101 = vld [vmem:[%s1 + $0x84] sm:$0xf]
    %v102 = vld [vmem:[%s1 + $0x88] sm:$0xf]
    %v103 = vld [vmem:[%s1 + $0x8c] sm:$0xf]
    %v104 = vld [vmem:[%s1 + $0x90] sm:$0xf]
    %v105 = vld [vmem:[%s1 + $0x94] sm:$0xf]
    %v106 = vld [vmem:[%s1 + $0x98] sm:$0xf]
    %v107 = vld [vmem:[%s1 + $0x9c] sm:$0xf]
    %v108 = vld [vmem:[%s1 + $0xa0] sm:$0xf]
    %v109 = vld [vmem:[%s1 + $0xa4] sm:$0xf]
    %v110 = vld [vmem:[%s1 + $0xa8] sm:$0xf]
    %v111 = vld [vmem:[%s1 + $0xac] sm:$0xf]
    %v112 = vld [vmem:[%s1 + $0xb0] sm:$0xf]
    %v113 = vld [vmem:[%s1 + $0xb4] sm:$0xf]
    %v114 = vld [vmem:[%s1 + $0xb8] sm:$0xf]
    %v115 = vld [vmem:[%s1 + $0xbc] sm:$0xf]
    %v164 = vunpack.c.l.b16 %v68
    %v165 = vunpack.c.l.b16 %v69
    %v166 = vunpack.c.l.b16 %v70
    %v167 = vunpack.c.l.b16 %v71
    %v168 = vunpack.c.l.b16 %v72
    %v169 = vunpack.c.l.b16 %v73
    %v170 = vunpack.c.l.b16 %v74
    %v171 = vunpack.c.l.b16 %v75
    %v172 = vunpack.c.l.b16 %v76
    %v173 = vunpack.c.l.b16 %v77
    %v174 = vunpack.c.l.b16 %v78
    %v175 = vunpack.c.l.b16 %v79
    %v176 = vunpack.c.l.b16 %v80
    %v177 = vunpack.c.l.b16 %v81
    %v178 = vunpack.c.l.b16 %v82
    %v179 = vunpack.c.l.b16 %v83
    %v180 = vunpack.c.l.b16 %v84
    %v181 = vunpack.c.l.b16 %v85
    %v182 = vunpack.c.l.b16 %v86
    %v183 = vunpack.c.l.b16 %v87
    %v184 = vunpack.c.l.b16 %v88
    %v185 = vunpack.c.l.b16 %v89
    %v186 = vunpack.c.l.b16 %v90
    %v187 = vunpack.c.l.b16 %v91
    %v188 = vunpack.c.l.b16 %v92
    %v189 = vunpack.c.l.b16 %v93
    %v190 = vunpack.c.l.b16 %v94
    %v191 = vunpack.c.l.b16 %v95
    %v192 = vunpack.c.l.b16 %v96
    %v193 = vunpack.c.l.b16 %v97
    %v194 = vunpack.c.l.b16 %v98
    %v195 = vunpack.c.l.b16 %v99
    %v196 = vunpack.c.l.b16 %v100
    %v197 = vunpack.c.l.b16 %v101
    %v198 = vunpack.c.l.b16 %v102
    %v199 = vunpack.c.l.b16 %v103
    %v200 = vunpack.c.l.b16 %v104
    %v201 = vunpack.c.l.b16 %v105
    %v202 = vunpack.c.l.b16 %v106
    %v203 = vunpack.c.l.b16 %v107
    %v204 = vunpack.c.l.b16 %v108
    %v205 = vunpack.c.l.b16 %v109
    %v206 = vunpack.c.l.b16 %v110
    %v207 = vunpack.c.l.b16 %v111
    %v208 = vunpack.c.l.b16 %v112
    %v209 = vunpack.c.l.b16 %v113
    %v210 = vunpack.c.l.b16 %v114
    %v211 = vunpack.c.l.b16 %v115
    %v212 = vpack.c.b16 %v165, %v164
    %v213 = vpack.c.b16 %v167, %v166
    %v214 = vpack.c.b16 %v169, %v168
    %v215 = vpack.c.b16 %v171, %v170
    %v216 = vpack.c.b16 %v173, %v172
    %v217 = vpack.c.b16 %v175, %v174
    %v218 = vpack.c.b16 %v177, %v176
    %v219 = vpack.c.b16 %v179, %v178
    %v220 = vpack.c.b16 %v181, %v180
    %v221 = vpack.c.b16 %v183, %v182
    %v222 = vpack.c.b16 %v185, %v184
    %v223 = vpack.c.b16 %v187, %v186
    %v224 = vpack.c.b16 %v189, %v188
    %v225 = vpack.c.b16 %v191, %v190
    %v226 = vpack.c.b16 %v193, %v192
    %v227 = vpack.c.b16 %v195, %v194
    %v228 = vpack.c.b16 %v197, %v196
    %v229 = vpack.c.b16 %v199, %v198
    %v230 = vpack.c.b16 %v201, %v200
    %v231 = vpack.c.b16 %v203, %v202
    %v232 = vpack.c.b16 %v205, %v204
    %v233 = vpack.c.b16 %v207, %v206
    %v234 = vpack.c.b16 %v209, %v208
    %v235 = vpack.c.b16 %v211, %v210
    %260 = vmatprep.subr.bf16.mxu0 0
    %261 = vmatpush1.bf16.msra.mxu0 %v212
    %262 = vmatprep.subr.bf16.mxu0 0
    %263 = vmatpush1.bf16.msra.mxu0 %v213
    %264 = vmatprep.subr.bf16.mxu0 0
    %265 = vmatpush1.bf16.msra.mxu0 %v214
    %266 = vmatprep.subr.bf16.mxu0 0
    %267 = vmatpush1.bf16.msra.mxu0 %v215
    %268 = vmatprep.subr.bf16.mxu0 0
    %269 = vmatpush1.bf16.msra.mxu0 %v216
    %270 = vmatprep.subr.bf16.mxu0 0
    %271 = vmatpush1.bf16.msra.mxu0 %v217
    %272 = vmatprep.subr.bf16.mxu0 0
    %273 = vmatpush1.bf16.msra.mxu0 %v218
    %274 = vmatprep.subr.bf16.mxu0 0
    %275 = vmatpush1.bf16.msra.mxu0 %v219
    %276 = vmatprep.subr.bf16.mxu0 0
    %277 = vmatpush1.bf16.msra.mxu0 %v220
    %278 = vmatprep.subr.bf16.mxu0 0
    %279 = vmatpush1.bf16.msra.mxu0 %v221
    %280 = vmatprep.subr.bf16.mxu0 0
    %281 = vmatpush1.bf16.msra.mxu0 %v222
    %282 = vmatprep.subr.bf16.mxu0 0
    %283 = vmatpush1.bf16.msra.mxu0 %v223
    %284 = vmatprep.subr.bf16.mxu0 0
    %285 = vmatpush1.bf16.msra.mxu0 %v224
    %286 = vmatprep.subr.bf16.mxu0 0
    %287 = vmatpush1.bf16.msra.mxu0 %v225
    %288 = vmatprep.subr.bf16.mxu0 0
    %289 = vmatpush1.bf16.msra.mxu0 %v226
    %290 = vmatprep.subr.bf16.mxu0 0
    %291 = vmatpush1.bf16.msra.mxu0 %v227
    %292 = vmatprep.mubr.bf16.mxu0 %v63
    %293 = vmatmul.mubr.bf16.gmra.mrb[0].mxu0 %v62
    %v294 = vpop.f32.mrb[0].mxu0
    %v295 = vadd.f32 0.0, %v294
    %v296 = vpop.f32.mrb[0].mxu0
    %v297 = vpop.f32.mrb[0].mxu0
    %v298 = vadd.f32 0.0, %v297
    %v299 = vpop.f32.mrb[0].mxu0
    %300 = vmatprep.mubr.bf16.mxu0 %v66
    %301 = vmatmul.mubr.bf16.gmra.mrb[0].mxu0 %v65
    %v302 = vpop.f32.mrb[0].mxu0
    %v303 = vadd.f32 0.0, %v302
    %v304 = vpop.f32.mrb[0].mxu0
    %v305 = vpop.f32.mrb[0].mxu0
    %v306 = vadd.f32 0.0, %v305
    %v307 = vpop.f32.mrb[0].mxu0
    %308 = vdwg.mxu0
    %309 = vmatprep.subr.bf16.mxu0 0
    %310 = vmatpush1.bf16.msra.mxu0 %v228
    %311 = vmatprep.subr.bf16.mxu0 0
    %312 = vmatpush1.bf16.msra.mxu0 %v229
    %313 = vmatprep.subr.bf16.mxu0 0
    %314 = vmatpush1.bf16.msra.mxu0 %v230
    %315 = vmatprep.subr.bf16.mxu0 0
    %316 = vmatpush1.bf16.msra.mxu0 %v231
    %317 = vmatprep.subr.bf16.mxu0 0
    %318 = vmatpush1.bf16.msra.mxu0 %v232
    %319 = vmatprep.subr.bf16.mxu0 0
    %320 = vmatpush1.bf16.msra.mxu0 %v233
    %321 = vmatprep.subr.bf16.mxu0 0
    %322 = vmatpush1.bf16.msra.mxu0 %v234
    %323 = vmatprep.subr.bf16.mxu0 0
    %324 = vmatpush1.bf16.msra.mxu0 %v235
    %325 = vmatprep.subr.bf16.mxu0 0
    %326 = vmatpush1.bf16.msra.mxu0 0
    %327 = vmatprep.subr.bf16.mxu0 0
    %328 = vmatpush1.bf16.msra.mxu0 0
    %329 = vmatprep.subr.bf16.mxu0 0
    %330 = vmatpush1.bf16.msra.mxu0 0
    %331 = vmatprep.subr.bf16.mxu0 0
    %332 = vmatpush1.bf16.msra.mxu0 0
    %333 = vmatprep.subr.bf16.mxu0 0
    %334 = vmatpush1.bf16.msra.mxu0 0
    %335 = vmatprep.subr.bf16.mxu0 0
    %336 = vmatpush1.bf16.msra.mxu0 0
    %337 = vmatprep.subr.bf16.mxu0 0
    %338 = vmatpush1.bf16.msra.mxu0 0
    %339 = vmatprep.subr.bf16.mxu0 0
    %340 = vmatpush1.bf16.msra.mxu0 0
    %341 = vmatprep.mubr.bf16.mxu0 0
    %342 = vmatmul.mubr.bf16.gmra.mrb[0].mxu0 %v64
    %v343 = vpop.f32.mrb[0].mxu0
    %v344 = vadd.f32 %v295, %v343
    %v345 = vpop.f32.mrb[0].mxu0
    %v346 = vpop.f32.mrb[0].mxu0
    %v347 = vadd.f32 %v298, %v346
    %v348 = vpop.f32.mrb[0].mxu0
    %349 = vmatprep.mubr.bf16.mxu0 0
    %350 = vmatmul.mubr.bf16.gmra.mrb[0].mxu0 %v67
    %v351 = vpop.f32.mrb[0].mxu0
    %v352 = vadd.f32 %v303, %v351
    %v353 = vpop.f32.mrb[0].mxu0
    %v354 = vpop.f32.mrb[0].mxu0
    %v355 = vadd.f32 %v306, %v354
    %v356 = vpop.f32.mrb[0].mxu0
    %357 = vdwg.mxu0
    %v358 = vmul.f32 %v344, %v344
    %v359 = vmul.f32 %v347, %v347
    %v360 = vmul.f32 %v352, %v352
    %v361 = vmul.f32 %v355, %v355
    %v362 = vadd.f32 %v344, %v347
    %v363 = vadd.f32 %v362, %v352
    %v364 = vadd.f32 %v363, %v355
    %v365 = vrot.slane %v364, 4
    %v366 = vadd.f32 %v364, %v365
    %v367 = vrot.slane %v366, 2
    %v368 = vadd.f32 %v366, %v367
    %v369 = vrot.slane %v368, 1
    %v370 = vadd.f32 %v368, %v369
    %v371 = vadd.f32 %v358, %v359
    %v372 = vadd.f32 %v371, %v360
    %v373 = vadd.f32 %v372, %v361
    %v374 = vrot.slane %v373, 4
    %v375 = vadd.f32 %v373, %v374
    %v376 = vrot.slane %v375, 2
    %v377 = vadd.f32 %v375, %v376
    %v378 = vrot.slane %v377, 1
    %v379 = vadd.f32 %v377, %v378
    %380 = vrot.lane.b32.xlu0 %v370, 8
    %v381 = vpop.permute.xlu0 %380
    %v382 = vadd.f32 %v370, %v381
    %383 = vrot.lane.b32.xlu0 %v382, 16
    %v384 = vpop.permute.xlu0 %383
    %v385 = vadd.f32 %v382, %v384
    %386 = vrot.lane.b32.xlu0 %v385, 32
    %v387 = vpop.permute.xlu0 %386
    %v388 = vadd.f32 %v385, %v387
    %389 = vrot.lane.b32.xlu0 %v388, 64
    %v390 = vpop.permute.xlu0 %389
    %v391 = vadd.f32 %v388, %v390
    %v392 = vmul.f32 %v391, 0.001953125
    %393 = vrot.lane.b32.xlu0 %v379, 8
    %v394 = vpop.permute.xlu0 %393
    %v395 = vadd.f32 %v379, %v394
    %396 = vrot.lane.b32.xlu0 %v395, 16
    %v397 = vpop.permute.xlu0 %396
    %v398 = vadd.f32 %v395, %v397
    %399 = vrot.lane.b32.xlu0 %v398, 32
    %v400 = vpop.permute.xlu0 %399
    %v401 = vadd.f32 %v398, %v400
    %402 = vrot.lane.b32.xlu0 %v401, 64
    %v403 = vpop.permute.xlu0 %402
    %v404 = vadd.f32 %v401, %v403
    %v405 = vmul.f32 %v404, 0.001953125
    %v406 = vmul.f32 %v392, %v392
    %v407 = vsub.f32 %v405, %v406
    %v408 = vld [vmem:[%s3] sm:$0x1]
    %v409 = vadd.f32 %v407, 1e-05
    %v410 = vrsqrt.pop %v409
    %v411 = vmul.f32 %v408, %v410
    %v412 = vld [vmem:[%s4] sm:$0x1]
    %v413 = vmul.f32 %v392, %v411
    %v414 = vsub.f32 %v412, %v413
    %v416 = vlaneseq
    %v417 = vshrl.u32 %v416, 7
    %v418 = vsub.s32 0, %v417
    %v419 = vrot.slane %v411, %v418
    %v421 = vmul.f32 %v344, %v419
    %v422 = vmul.f32 %v347, %v419
    %v423 = vmul.f32 %v352, %v419
    %v424 = vmul.f32 %v355, %v419
    %v426 = vlaneseq
    %v427 = vshrl.u32 %v426, 7
    %v428 = vsub.s32 0, %v427
    %v429 = vrot.slane %v414, %v428
    %v431 = vadd.f32 %v421, %v429
    %v432 = vadd.f32 %v422, %v429
    %v433 = vadd.f32 %v423, %v429
    %v434 = vadd.f32 %v424, %v429
    %v435 = vmax.f32 %v431, 0.0
    %v436 = vmax.f32 %v432, 0.0
    %v437 = vmax.f32 %v433, 0.0
    %v438 = vmax.f32 %v434, 0.0
    %v443 = vrot.slane %v435, 7
    %v444 = vrot.slane %v436, 7
    %v445 = vsel %vm36, %v443, %v444
    %v446 = vrot.slane %v437, 7
    %v447 = vrot.slane %v438, 7
    %v448 = vsel %vm36, %v446, %v447
    %v453 = vsel %vm36, 0.0, %v443
    %v454 = vsel %vm36, 0.0, %v446
    %v455 = vrot.slane %v435, 1
    %v456 = vrot.slane %v436, 1
    %v457 = vsel %vm49, %v455, %v456
    %v458 = vrot.slane %v437, 1
    %v459 = vrot.slane %v438, 1
    %v460 = vsel %vm49, %v458, %v459
    %v465 = vsel %vm49, %v456, 0.0
    %v466 = vsel %vm49, %v459, 0.0
    %v467 = vpack.c.bf16 %v445, %v453
    %v468 = vpack.c.bf16 %v436, %v435
    %v469 = vpack.c.bf16 %v465, %v457
    %v470 = vpack.c.bf16 %v448, %v454
    %v471 = vpack.c.bf16 %v438, %v437
    %v472 = vpack.c.bf16 %v466, %v460
    %v473 = vld [vmem:[%s2] sm:$0xf]
    %v474 = vld [vmem:[%s2 + $0x4] sm:$0xf]
    %v475 = vld [vmem:[%s2 + $0x8] sm:$0xf]
    %v476 = vld [vmem:[%s2 + $0xc] sm:$0xf]
    %v477 = vld [vmem:[%s2 + $0x10] sm:$0xf]
    %v478 = vld [vmem:[%s2 + $0x14] sm:$0xf]
    %v479 = vld [vmem:[%s2 + $0x18] sm:$0xf]
    %v480 = vld [vmem:[%s2 + $0x1c] sm:$0xf]
    %v481 = vld [vmem:[%s2 + $0x20] sm:$0xf]
    %v482 = vld [vmem:[%s2 + $0x24] sm:$0xf]
    %v483 = vld [vmem:[%s2 + $0x28] sm:$0xf]
    %v484 = vld [vmem:[%s2 + $0x2c] sm:$0xf]
    %v485 = vld [vmem:[%s2 + $0x30] sm:$0xf]
    %v486 = vld [vmem:[%s2 + $0x34] sm:$0xf]
    %v487 = vld [vmem:[%s2 + $0x38] sm:$0xf]
    %v488 = vld [vmem:[%s2 + $0x3c] sm:$0xf]
    %v489 = vld [vmem:[%s2 + $0x40] sm:$0xf]
    %v490 = vld [vmem:[%s2 + $0x44] sm:$0xf]
    %v491 = vld [vmem:[%s2 + $0x48] sm:$0xf]
    %v492 = vld [vmem:[%s2 + $0x4c] sm:$0xf]
    %v493 = vld [vmem:[%s2 + $0x50] sm:$0xf]
    %v494 = vld [vmem:[%s2 + $0x54] sm:$0xf]
    %v495 = vld [vmem:[%s2 + $0x58] sm:$0xf]
    %v496 = vld [vmem:[%s2 + $0x5c] sm:$0xf]
    %v497 = vld [vmem:[%s2 + $0x60] sm:$0xf]
    %v498 = vld [vmem:[%s2 + $0x64] sm:$0xf]
    %v499 = vld [vmem:[%s2 + $0x68] sm:$0xf]
    %v500 = vld [vmem:[%s2 + $0x6c] sm:$0xf]
    %v501 = vld [vmem:[%s2 + $0x70] sm:$0xf]
    %v502 = vld [vmem:[%s2 + $0x74] sm:$0xf]
    %v503 = vld [vmem:[%s2 + $0x78] sm:$0xf]
    %v504 = vld [vmem:[%s2 + $0x7c] sm:$0xf]
    %v505 = vld [vmem:[%s2 + $0x80] sm:$0xf]
    %v506 = vld [vmem:[%s2 + $0x84] sm:$0xf]
    %v507 = vld [vmem:[%s2 + $0x88] sm:$0xf]
    %v508 = vld [vmem:[%s2 + $0x8c] sm:$0xf]
    %v509 = vld [vmem:[%s2 + $0x90] sm:$0xf]
    %v510 = vld [vmem:[%s2 + $0x94] sm:$0xf]
    %v511 = vld [vmem:[%s2 + $0x98] sm:$0xf]
    %v512 = vld [vmem:[%s2 + $0x9c] sm:$0xf]
    %v513 = vld [vmem:[%s2 + $0xa0] sm:$0xf]
    %v514 = vld [vmem:[%s2 + $0xa4] sm:$0xf]
    %v515 = vld [vmem:[%s2 + $0xa8] sm:$0xf]
    %v516 = vld [vmem:[%s2 + $0xac] sm:$0xf]
    %v517 = vld [vmem:[%s2 + $0xb0] sm:$0xf]
    %v518 = vld [vmem:[%s2 + $0xb4] sm:$0xf]
    %v519 = vld [vmem:[%s2 + $0xb8] sm:$0xf]
    %v520 = vld [vmem:[%s2 + $0xbc] sm:$0xf]
    %v569 = vunpack.c.l.b16 %v473
    %v570 = vunpack.c.l.b16 %v474
    %v571 = vunpack.c.l.b16 %v475
    %v572 = vunpack.c.l.b16 %v476
    %v573 = vunpack.c.l.b16 %v477
    %v574 = vunpack.c.l.b16 %v478
    %v575 = vunpack.c.l.b16 %v479
    %v576 = vunpack.c.l.b16 %v480
    %v577 = vunpack.c.l.b16 %v481
    %v578 = vunpack.c.l.b16 %v482
    %v579 = vunpack.c.l.b16 %v483
    %v580 = vunpack.c.l.b16 %v484
    %v581 = vunpack.c.l.b16 %v485
    %v582 = vunpack.c.l.b16 %v486
    %v583 = vunpack.c.l.b16 %v487
    %v584 = vunpack.c.l.b16 %v488
    %v585 = vunpack.c.l.b16 %v489
    %v586 = vunpack.c.l.b16 %v490
    %v587 = vunpack.c.l.b16 %v491
    %v588 = vunpack.c.l.b16 %v492
    %v589 = vunpack.c.l.b16 %v493
    %v590 = vunpack.c.l.b16 %v494
    %v591 = vunpack.c.l.b16 %v495
    %v592 = vunpack.c.l.b16 %v496
    %v593 = vunpack.c.l.b16 %v497
    %v594 = vunpack.c.l.b16 %v498
    %v595 = vunpack.c.l.b16 %v499
    %v596 = vunpack.c.l.b16 %v500
    %v597 = vunpack.c.l.b16 %v501
    %v598 = vunpack.c.l.b16 %v502
    %v599 = vunpack.c.l.b16 %v503
    %v600 = vunpack.c.l.b16 %v504
    %v601 = vunpack.c.l.b16 %v505
    %v602 = vunpack.c.l.b16 %v506
    %v603 = vunpack.c.l.b16 %v507
    %v604 = vunpack.c.l.b16 %v508
    %v605 = vunpack.c.l.b16 %v509
    %v606 = vunpack.c.l.b16 %v510
    %v607 = vunpack.c.l.b16 %v511
    %v608 = vunpack.c.l.b16 %v512
    %v609 = vunpack.c.l.b16 %v513
    %v610 = vunpack.c.l.b16 %v514
    %v611 = vunpack.c.l.b16 %v515
    %v612 = vunpack.c.l.b16 %v516
    %v613 = vunpack.c.l.b16 %v517
    %v614 = vunpack.c.l.b16 %v518
    %v615 = vunpack.c.l.b16 %v519
    %v616 = vunpack.c.l.b16 %v520
    %v617 = vpack.c.b16 %v570, %v569
    %v618 = vpack.c.b16 %v572, %v571
    %v619 = vpack.c.b16 %v574, %v573
    %v620 = vpack.c.b16 %v576, %v575
    %v621 = vpack.c.b16 %v578, %v577
    %v622 = vpack.c.b16 %v580, %v579
    %v623 = vpack.c.b16 %v582, %v581
    %v624 = vpack.c.b16 %v584, %v583
    %v625 = vpack.c.b16 %v586, %v585
    %v626 = vpack.c.b16 %v588, %v587
    %v627 = vpack.c.b16 %v590, %v589
    %v628 = vpack.c.b16 %v592, %v591
    %v629 = vpack.c.b16 %v594, %v593
    %v630 = vpack.c.b16 %v596, %v595
    %v631 = vpack.c.b16 %v598, %v597
    %v632 = vpack.c.b16 %v600, %v599
    %v633 = vpack.c.b16 %v602, %v601
    %v634 = vpack.c.b16 %v604, %v603
    %v635 = vpack.c.b16 %v606, %v605
    %v636 = vpack.c.b16 %v608, %v607
    %v637 = vpack.c.b16 %v610, %v609
    %v638 = vpack.c.b16 %v612, %v611
    %v639 = vpack.c.b16 %v614, %v613
    %v640 = vpack.c.b16 %v616, %v615
    %665 = vmatprep.subr.bf16.mxu0 0
    %666 = vmatpush1.bf16.msra.mxu0 %v617
    %667 = vmatprep.subr.bf16.mxu0 0
    %668 = vmatpush1.bf16.msra.mxu0 %v618
    %669 = vmatprep.subr.bf16.mxu0 0
    %670 = vmatpush1.bf16.msra.mxu0 %v619
    %671 = vmatprep.subr.bf16.mxu0 0
    %672 = vmatpush1.bf16.msra.mxu0 %v620
    %673 = vmatprep.subr.bf16.mxu0 0
    %674 = vmatpush1.bf16.msra.mxu0 %v621
    %675 = vmatprep.subr.bf16.mxu0 0
    %676 = vmatpush1.bf16.msra.mxu0 %v622
    %677 = vmatprep.subr.bf16.mxu0 0
    %678 = vmatpush1.bf16.msra.mxu0 %v623
    %679 = vmatprep.subr.bf16.mxu0 0
    %680 = vmatpush1.bf16.msra.mxu0 %v624
    %681 = vmatprep.subr.bf16.mxu0 0
    %682 = vmatpush1.bf16.msra.mxu0 %v625
    %683 = vmatprep.subr.bf16.mxu0 0
    %684 = vmatpush1.bf16.msra.mxu0 %v626
    %685 = vmatprep.subr.bf16.mxu0 0
    %686 = vmatpush1.bf16.msra.mxu0 %v627
    %687 = vmatprep.subr.bf16.mxu0 0
    %688 = vmatpush1.bf16.msra.mxu0 %v628
    %689 = vmatprep.subr.bf16.mxu0 0
    %690 = vmatpush1.bf16.msra.mxu0 %v629
    %691 = vmatprep.subr.bf16.mxu0 0
    %692 = vmatpush1.bf16.msra.mxu0 %v630
    %693 = vmatprep.subr.bf16.mxu0 0
    %694 = vmatpush1.bf16.msra.mxu0 %v631
    %695 = vmatprep.subr.bf16.mxu0 0
    %696 = vmatpush1.bf16.msra.mxu0 %v632
    %697 = vmatprep.mubr.bf16.mxu0 %v468
    %698 = vmatmul.mubr.bf16.gmra.mrb[0].mxu0 %v467
    %v699 = vpop.f32.mrb[0].mxu0
    %v700 = vadd.f32 0.0, %v699
    %v701 = vpop.f32.mrb[0].mxu0
    %v702 = vpop.f32.mrb[0].mxu0
    %v703 = vadd.f32 0.0, %v702
    %v704 = vpop.f32.mrb[0].mxu0
    %705 = vmatprep.mubr.bf16.mxu0 %v471
    %706 = vmatmul.mubr.bf16.gmra.mrb[0].mxu0 %v470
    %v707 = vpop.f32.mrb[0].mxu0
    %v708 = vadd.f32 0.0, %v707
    %v709 = vpop.f32.mrb[0].mxu0
    %v710 = vpop.f32.mrb[0].mxu0
    %v711 = vadd.f32 0.0, %v710
    %v712 = vpop.f32.mrb[0].mxu0
    %713 = vdwg.mxu0
    %714 = vmatprep.subr.bf16.mxu0 0
    %715 = vmatpush1.bf16.msra.mxu0 %v633
    %716 = vmatprep.subr.bf16.mxu0 0
    %717 = vmatpush1.bf16.msra.mxu0 %v634
    %718 = vmatprep.subr.bf16.mxu0 0
    %719 = vmatpush1.bf16.msra.mxu0 %v635
    %720 = vmatprep.subr.bf16.mxu0 0
    %721 = vmatpush1.bf16.msra.mxu0 %v636
    %722 = vmatprep.subr.bf16.mxu0 0
    %723 = vmatpush1.bf16.msra.mxu0 %v637
    %724 = vmatprep.subr.bf16.mxu0 0
    %725 = vmatpush1.bf16.msra.mxu0 %v638
    %726 = vmatprep.subr.bf16.mxu0 0
    %727 = vmatpush1.bf16.msra.mxu0 %v639
    %728 = vmatprep.subr.bf16.mxu0 0
    %729 = vmatpush1.bf16.msra.mxu0 %v640
    %730 = vmatprep.subr.bf16.mxu0 0
    %731 = vmatpush1.bf16.msra.mxu0 0
    %732 = vmatprep.subr.bf16.mxu0 0
    %733 = vmatpush1.bf16.msra.mxu0 0
    %734 = vmatprep.subr.bf16.mxu0 0
    %735 = vmatpush1.bf16.msra.mxu0 0
    %736 = vmatprep.subr.bf16.mxu0 0
    %737 = vmatpush1.bf16.msra.mxu0 0
    %738 = vmatprep.subr.bf16.mxu0 0
    %739 = vmatpush1.bf16.msra.mxu0 0
    %740 = vmatprep.subr.bf16.mxu0 0
    %741 = vmatpush1.bf16.msra.mxu0 0
    %742 = vmatprep.subr.bf16.mxu0 0
    %743 = vmatpush1.bf16.msra.mxu0 0
    %744 = vmatprep.subr.bf16.mxu0 0
    %745 = vmatpush1.bf16.msra.mxu0 0
    %746 = vmatprep.mubr.bf16.mxu0 0
    %747 = vmatmul.mubr.bf16.gmra.mrb[0].mxu0 %v469
    %v748 = vpop.f32.mrb[0].mxu0
    %v749 = vadd.f32 %v700, %v748
    %v750 = vpop.f32.mrb[0].mxu0
    %v751 = vpop.f32.mrb[0].mxu0
    %v752 = vadd.f32 %v703, %v751
    %v753 = vpop.f32.mrb[0].mxu0
    %754 = vmatprep.mubr.bf16.mxu0 0
    %755 = vmatmul.mubr.bf16.gmra.mrb[0].mxu0 %v472
    %v756 = vpop.f32.mrb[0].mxu0
    %v757 = vadd.f32 %v708, %v756
    %v758 = vpop.f32.mrb[0].mxu0
    %v759 = vpop.f32.mrb[0].mxu0
    %v760 = vadd.f32 %v711, %v759
    %v761 = vpop.f32.mrb[0].mxu0
    %762 = vdwg.mxu0
    %v763 = vmul.f32 %v749, %v749
    %v764 = vmul.f32 %v752, %v752
    %v765 = vmul.f32 %v757, %v757
    %v766 = vmul.f32 %v760, %v760
    %v767 = vadd.f32 %v749, %v752
    %v768 = vadd.f32 %v767, %v757
    %v769 = vadd.f32 %v768, %v760
    %v770 = vrot.slane %v769, 4
    %v771 = vadd.f32 %v769, %v770
    %v772 = vrot.slane %v771, 2
    %v773 = vadd.f32 %v771, %v772
    %v774 = vrot.slane %v773, 1
    %v775 = vadd.f32 %v773, %v774
    %v776 = vadd.f32 %v763, %v764
    %v777 = vadd.f32 %v776, %v765
    %v778 = vadd.f32 %v777, %v766
    %v779 = vrot.slane %v778, 4
    %v780 = vadd.f32 %v778, %v779
    %v781 = vrot.slane %v780, 2
    %v782 = vadd.f32 %v780, %v781
    %v783 = vrot.slane %v782, 1
    %v784 = vadd.f32 %v782, %v783
    %785 = vrot.lane.b32.xlu0 %v775, 8
    %v786 = vpop.permute.xlu0 %785
    %v787 = vadd.f32 %v775, %v786
    %788 = vrot.lane.b32.xlu0 %v787, 16
    %v789 = vpop.permute.xlu0 %788
    %v790 = vadd.f32 %v787, %v789
    %791 = vrot.lane.b32.xlu0 %v790, 32
    %v792 = vpop.permute.xlu0 %791
    %v793 = vadd.f32 %v790, %v792
    %794 = vrot.lane.b32.xlu0 %v793, 64
    %v795 = vpop.permute.xlu0 %794
    %v796 = vadd.f32 %v793, %v795
    %v797 = vmul.f32 %v796, 0.001953125
    %798 = vrot.lane.b32.xlu0 %v784, 8
    %v799 = vpop.permute.xlu0 %798
    %v800 = vadd.f32 %v784, %v799
    %801 = vrot.lane.b32.xlu0 %v800, 16
    %v802 = vpop.permute.xlu0 %801
    %v803 = vadd.f32 %v800, %v802
    %804 = vrot.lane.b32.xlu0 %v803, 32
    %v805 = vpop.permute.xlu0 %804
    %v806 = vadd.f32 %v803, %v805
    %807 = vrot.lane.b32.xlu0 %v806, 64
    %v808 = vpop.permute.xlu0 %807
    %v809 = vadd.f32 %v806, %v808
    %v810 = vmul.f32 %v809, 0.001953125
    %v811 = vmul.f32 %v797, %v797
    %v812 = vsub.f32 %v810, %v811
    %v813 = vld [vmem:[%s5] sm:$0x1]
    %v814 = vadd.f32 %v812, 1e-05
    %v815 = vrsqrt.pop %v814
    %v816 = vmul.f32 %v813, %v815
    %v817 = vld [vmem:[%s6] sm:$0x1]
    %v818 = vmul.f32 %v797, %v816
    %v819 = vsub.f32 %v817, %v818
    %v821 = vlaneseq
    %v822 = vshrl.u32 %v821, 7
    %v823 = vsub.s32 0, %v822
    %v824 = vrot.slane %v816, %v823
    %v826 = vmul.f32 %v749, %v824
    %v827 = vmul.f32 %v752, %v824
    %v828 = vmul.f32 %v757, %v824
    %v829 = vmul.f32 %v760, %v824
    %v831 = vlaneseq
    %v832 = vshrl.u32 %v831, 7
    %v833 = vsub.s32 0, %v832
    %v834 = vrot.slane %v819, %v833
    %v836 = vadd.f32 %v826, %v834
    %v837 = vadd.f32 %v827, %v834
    %v838 = vadd.f32 %v828, %v834
    %v839 = vadd.f32 %v829, %v834
    %v840 = vadd.f32 %v28, %v836
    %v841 = vadd.f32 %v29, %v837
    %v842 = vadd.f32 %v30, %v838
    %v843 = vadd.f32 %v31, %v839
    %v844 = vmax.f32 %v840, 0.0
    %v845 = vmax.f32 %v841, 0.0
    %v846 = vmax.f32 %v842, 0.0
    %v847 = vmax.f32 %v843, 0.0
    %848 = vst [vmem:[#allocation2] sm:$0xff] %v844
    %849 = vst [vmem:[#allocation2 + $0x8] sm:$0xff] %v845
    %850 = vst [vmem:[#allocation2 + $0x10] sm:$0xff] %v846
    %851 = vst [vmem:[#allocation2 + $0x18] sm:$0xff] %v847
    // Predicated region
    $region30: #{resnet_block_forward_packed.1} parent=1 // pred_check
      _
    $region31: #{resnet_block_forward_packed.1} parent=1 // pred_check_branch
      %853 = sbr.rel (0) target = $region33
    $region32: #{resnet_block_forward_packed.1} parent=1 // pred_region
      %s855 = ssub.s32 512, 512
      %856 = vsyncadd [#allocation3], %s855
      %s857 = sshll.u32 [#allocation2], 4
      %s858 = int_to_ptr.vmem [resolvable:$true] %s857
      %863 = dma.vmem_to_hbm [thread:$0]  %s858, 512, %s7, [#allocation3], 128, 128, 8
    $region33: #{resnet_block_forward_packed.1} parent=1 // pred_fallthru
      _
    // Predicated region
    $region34: #{resnet_block_forward_packed.1} parent=1 // pred_check
      _
    $region35: #{resnet_block_forward_packed.1} parent=1 // pred_check_branch
      %865 = sbr.rel (0) target = $region37
    $region36: #{resnet_block_forward_packed.1} parent=1 // pred_region
      %866 = dma.done [#allocation3], 512
    $region37: #{resnet_block_forward_packed.1} parent=1 // pred_fallthru
      _
    %867 = vsyncpa [#allocation3], 1

</llo_original>
